<compile_context>
chip_gen: v7x
topology: tpu7x:2x2x1
jax: 0.10.0
libtpu: 0.0.40
codegen_flags: <defaults>
</compile_context>

<pallas_src>
import jax
import jax.numpy as jnp
from jax.experimental import pallas as pl
from jax.experimental.pallas import tpu as pltpu

# MinMaxScaler statistics (fit on the hard-coded disparity table in __init__)
_DISPARITIES = (112.5, 91.0, 78.5, 69.5, 62.0, 57.5, 46.5, 41.0, 35.5, 32.0,
                30.0, 27.0, 25.0, 24.5, 23.0, 22.5)
_DATA_MIN = float(min(_DISPARITIES))          # 22.5
_DATA_MAX = float(max(_DISPARITIES))          # 112.5
_INV_RANGE = 1.0 / (_DATA_MAX - _DATA_MIN)    # 1 / 90

_HIDDEN = 20      # fc1 width
_OUT = 3          # fc2 width
_LANE = 128       # lane width of the batch slab


def sizenet_kernel(x_ref, w1_ref, b1_ref, w2_ref, b2_ref, o_ref):
    # x_ref : VMEM [BR, 128]  -- a lane-dense block of the (padded) batch
    # w1_ref: SMEM [2, 20], b1_ref: SMEM [20], w2_ref: SMEM [20, 3], b2_ref: SMEM [3]
    # o_ref : VMEM [3, BR, 128]
    x = x_ref[...]                               # [BR, 128]
    xs = (x - _DATA_MIN) * _INV_RANGE            # MinMaxScaler.transform
    xs2 = xs * xs                                # polynomial feature

    zeros = jnp.zeros_like(xs)
    acc0 = zeros + b2_ref[0]
    acc1 = zeros + b2_ref[1]
    acc2 = zeros + b2_ref[2]

    # Fused fc1 + ReLU + fc2 on the VPU, unrolled over the 20 hidden units.
    # h_j = relu(xs * W1[0,j] + xs^2 * W1[1,j] + b1[j]); acc_k += h_j * W2[j,k]
    for j in range(_HIDDEN):
        h = jnp.maximum(xs * w1_ref[0, j] + xs2 * w1_ref[1, j] + b1_ref[j], 0.0)
        acc0 = acc0 + h * w2_ref[j, 0]
        acc1 = acc1 + h * w2_ref[j, 1]
        acc2 = acc2 + h * w2_ref[j, 2]

    # Lane-dense, unmasked full-width stores.
    o_ref[0, :, :] = acc0
    o_ref[1, :, :] = acc1
    o_ref[2, :, :] = acc2


def _round_up(a, b):
    return ((a + b - 1) // b) * b


def sizenet_forward(x, w1, b1, w2, b2, *, block_rows=512):
    """x: [N, 1] (or [N]) float32 disparities -> [N, 3] float32."""
    n = x.shape[0]
    x_flat = x.reshape(-1).astype(jnp.float32)                  # [N]

    # Lane-dense slab: pad N up to rows*128 with rows a multiple of block_rows.
    rows_needed = max(1, pl.cdiv(n, _LANE))
    br = min(block_rows, _round_up(rows_needed, 8))             # block rows (mult of 8)
    rows = _round_up(rows_needed, br)
    n_pad = rows * _LANE
    x2d = jnp.pad(x_flat, (0, n_pad - n)).reshape(rows, _LANE)  # [rows, 128]
    num_blocks = rows // br

    out = pl.pallas_call(
        sizenet_kernel,
        out_shape=jax.ShapeDtypeStruct((_OUT, rows, _LANE), jnp.float32),
        grid=(num_blocks,),
        in_specs=[
            pl.BlockSpec((br, _LANE), lambda i: (i, 0)),              # x block
            pl.BlockSpec(memory_space=pltpu.MemorySpace.SMEM),        # w1 [2, 20]
            pl.BlockSpec(memory_space=pltpu.MemorySpace.SMEM),        # b1 [20]
            pl.BlockSpec(memory_space=pltpu.MemorySpace.SMEM),        # w2 [20, 3]
            pl.BlockSpec(memory_space=pltpu.MemorySpace.SMEM),        # b2 [3]
        ],
        out_specs=pl.BlockSpec((_OUT, br, _LANE), lambda i: (0, i, 0)),
        compiler_params=pltpu.CompilerParams(
            dimension_semantics=("parallel",)),
    )(x2d, w1, b1, w2, b2)

    # [3, rows, 128] -> [3, n_pad] -> drop padding -> [N, 3]
    return out.reshape(_OUT, n_pad)[:, :n].T


def init_params(key):
    # Deterministic synthetic parameters, PyTorch-Linear-style uniform init.
    k1, k2, k3, k4 = jax.random.split(key, 4)
    bound1 = 1.0 / (2.0 ** 0.5)    # fan_in = 2
    bound2 = 1.0 / (20.0 ** 0.5)   # fan_in = 20
    w1 = jax.random.uniform(k1, (2, _HIDDEN), jnp.float32, -bound1, bound1)
    b1 = jax.random.uniform(k2, (_HIDDEN,), jnp.float32, -bound1, bound1)
    w2 = jax.random.uniform(k3, (_HIDDEN, _OUT), jnp.float32, -bound2, bound2)
    b2 = jax.random.uniform(k4, (_OUT,), jnp.float32, -bound2, bound2)
    return w1, b1, w2, b2


def reference_forward(x, w1, b1, w2, b2):
    hp = jax.lax.Precision.HIGHEST
    xs = (x - _DATA_MIN) * _INV_RANGE
    feat = jnp.concatenate([xs, xs * xs], axis=1)
    h = jnp.maximum(jnp.matmul(feat, w1, precision=hp) + b1[None, :], 0.0)
    return jnp.matmul(h, w2, precision=hp) + b2[None, :]


if __name__ == "__main__":
    key = jax.random.PRNGKey(0)
    kx1, kx2, kp = jax.random.split(key, 3)
    w1, b1, w2, b2 = init_params(kp)

    # Small batch (matches the production-style (N, 1) disparity input).
    N1 = 8
    x1 = jax.random.uniform(kx1, (N1, 1), jnp.float32, 22.5, 112.5)
    out1 = jax.block_until_ready(sizenet_forward(x1, w1, b1, w2, b2))
    ref1 = reference_forward(x1, w1, b1, w2, b2)
    assert out1.shape == (N1, 3)
    assert jnp.allclose(out1, ref1, atol=1e-4, rtol=1e-4)

    # Non-aligned batch to exercise padding + lane-dense slicing.
    N2 = 1333
    x2 = jax.random.uniform(kx2, (N2, 1), jnp.float32, 22.5, 112.5)
    out2 = jax.block_until_ready(sizenet_forward(x2, w1, b1, w2, b2))
    ref2 = reference_forward(x2, w1, b1, w2, b2)
    assert out2.shape == (N2, 3)
    assert jnp.allclose(out2, ref2, atol=1e-4, rtol=1e-4)

    print("KERNEL_OK")
</pallas_src>

<mosaic_0001>
module attributes {stable_mosaic.version = 11 : i64} {
  func.func @sizenet_kernel(%arg0: i32, %arg1: memref<8x128xf32, #tpu.memory_space<vmem>>, %arg2: memref<2x20xf32, #tpu.memory_space<smem>>, %arg3: memref<20xf32, #tpu.memory_space<smem>>, %arg4: memref<20x3xf32, #tpu.memory_space<smem>>, %arg5: memref<3xf32, #tpu.memory_space<smem>>, %arg6: memref<3x8x128xf32, #tpu.memory_space<vmem>>) attributes {dimension_semantics = [#tpu.dimension_semantics<parallel>], iteration_bounds = array<i64: 1>, scalar_prefetch = 0 : i64, scratch_operands = 0 : i64, tpu.core_type = #tpu.core_type<tc>, window_params = [{transform_indices = @transform_0, window_bounds = array<i64: 8, 128>}, {transform_indices = @transform_1, window_bounds = array<i64: 2, 20>}, {transform_indices = @transform_2, window_bounds = array<i64: 20>}, {transform_indices = @transform_3, window_bounds = array<i64: 20, 3>}, {transform_indices = @transform_4, window_bounds = array<i64: 3>}, {transform_indices = @transform_5, window_bounds = array<i64: 3, 8, 128>}]} {
    %c0 = arith.constant 0 : index
    %c0_0 = arith.constant 0 : index
    %0 = vector.load %arg1[%c0, %c0_0] : memref<8x128xf32, #tpu.memory_space<vmem>>, vector<8x128xf32>
    %cst = arith.constant 2.250000e+01 : f32
    %1 = vector.broadcast %cst : f32 to vector<8x128xf32>
    %2 = arith.subf %0, %1 : vector<8x128xf32>
    %cst_1 = arith.constant 0.0111111114 : f32
    %3 = vector.broadcast %cst_1 : f32 to vector<8x128xf32>
    %4 = arith.mulf %2, %3 : vector<8x128xf32>
    %5 = arith.mulf %4, %4 : vector<8x128xf32>
    %cst_2 = arith.constant 0.000000e+00 : f32
    %6 = vector.broadcast %cst_2 : f32 to vector<8x128xf32>
    %c0_3 = arith.constant 0 : index
    %7 = memref.load %arg5[%c0_3] : memref<3xf32, #tpu.memory_space<smem>>
    %8 = vector.broadcast %7 : f32 to vector<8x128xf32>
    %9 = arith.addf %6, %8 : vector<8x128xf32>
    %c1 = arith.constant 1 : index
    %10 = memref.load %arg5[%c1] : memref<3xf32, #tpu.memory_space<smem>>
    %11 = vector.broadcast %10 : f32 to vector<8x128xf32>
    %12 = arith.addf %6, %11 : vector<8x128xf32>
    %c2 = arith.constant 2 : index
    %13 = memref.load %arg5[%c2] : memref<3xf32, #tpu.memory_space<smem>>
    %14 = vector.broadcast %13 : f32 to vector<8x128xf32>
    %15 = arith.addf %6, %14 : vector<8x128xf32>
    %c0_4 = arith.constant 0 : index
    %c0_5 = arith.constant 0 : index
    %16 = memref.load %arg2[%c0_4, %c0_5] : memref<2x20xf32, #tpu.memory_space<smem>>
    %17 = vector.broadcast %16 : f32 to vector<8x128xf32>
    %18 = arith.mulf %4, %17 : vector<8x128xf32>
    %c1_6 = arith.constant 1 : index
    %c0_7 = arith.constant 0 : index
    %19 = memref.load %arg2[%c1_6, %c0_7] : memref<2x20xf32, #tpu.memory_space<smem>>
    %20 = vector.broadcast %19 : f32 to vector<8x128xf32>
    %21 = arith.mulf %5, %20 : vector<8x128xf32>
    %22 = arith.addf %18, %21 : vector<8x128xf32>
    %c0_8 = arith.constant 0 : index
    %23 = memref.load %arg3[%c0_8] : memref<20xf32, #tpu.memory_space<smem>>
    %24 = vector.broadcast %23 : f32 to vector<8x128xf32>
    %25 = arith.addf %22, %24 : vector<8x128xf32>
    %cst_9 = arith.constant 0.000000e+00 : f32
    %26 = vector.broadcast %cst_9 : f32 to vector<8x128xf32>
    %27 = arith.maximumf %25, %26 : vector<8x128xf32>
    %c0_10 = arith.constant 0 : index
    %c0_11 = arith.constant 0 : index
    %28 = memref.load %arg4[%c0_10, %c0_11] : memref<20x3xf32, #tpu.memory_space<smem>>
    %29 = vector.broadcast %28 : f32 to vector<8x128xf32>
    %30 = arith.mulf %27, %29 : vector<8x128xf32>
    %31 = arith.addf %9, %30 : vector<8x128xf32>
    %c0_12 = arith.constant 0 : index
    %c1_13 = arith.constant 1 : index
    %32 = memref.load %arg4[%c0_12, %c1_13] : memref<20x3xf32, #tpu.memory_space<smem>>
    %33 = vector.broadcast %32 : f32 to vector<8x128xf32>
    %34 = arith.mulf %27, %33 : vector<8x128xf32>
    %35 = arith.addf %12, %34 : vector<8x128xf32>
    %c0_14 = arith.constant 0 : index
    %c2_15 = arith.constant 2 : index
    %36 = memref.load %arg4[%c0_14, %c2_15] : memref<20x3xf32, #tpu.memory_space<smem>>
    %37 = vector.broadcast %36 : f32 to vector<8x128xf32>
    %38 = arith.mulf %27, %37 : vector<8x128xf32>
    %39 = arith.addf %15, %38 : vector<8x128xf32>
    %c0_16 = arith.constant 0 : index
    %c1_17 = arith.constant 1 : index
    %40 = memref.load %arg2[%c0_16, %c1_17] : memref<2x20xf32, #tpu.memory_space<smem>>
    %41 = vector.broadcast %40 : f32 to vector<8x128xf32>
    %42 = arith.mulf %4, %41 : vector<8x128xf32>
    %c1_18 = arith.constant 1 : index
    %c1_19 = arith.constant 1 : index
    %43 = memref.load %arg2[%c1_18, %c1_19] : memref<2x20xf32, #tpu.memory_space<smem>>
    %44 = vector.broadcast %43 : f32 to vector<8x128xf32>
    %45 = arith.mulf %5, %44 : vector<8x128xf32>
    %46 = arith.addf %42, %45 : vector<8x128xf32>
    %c1_20 = arith.constant 1 : index
    %47 = memref.load %arg3[%c1_20] : memref<20xf32, #tpu.memory_space<smem>>
    %48 = vector.broadcast %47 : f32 to vector<8x128xf32>
    %49 = arith.addf %46, %48 : vector<8x128xf32>
    %cst_21 = arith.constant 0.000000e+00 : f32
    %50 = vector.broadcast %cst_21 : f32 to vector<8x128xf32>
    %51 = arith.maximumf %49, %50 : vector<8x128xf32>
    %c1_22 = arith.constant 1 : index
    %c0_23 = arith.constant 0 : index
    %52 = memref.load %arg4[%c1_22, %c0_23] : memref<20x3xf32, #tpu.memory_space<smem>>
    %53 = vector.broadcast %52 : f32 to vector<8x128xf32>
    %54 = arith.mulf %51, %53 : vector<8x128xf32>
    %55 = arith.addf %31, %54 : vector<8x128xf32>
    %c1_24 = arith.constant 1 : index
    %c1_25 = arith.constant 1 : index
    %56 = memref.load %arg4[%c1_24, %c1_25] : memref<20x3xf32, #tpu.memory_space<smem>>
    %57 = vector.broadcast %56 : f32 to vector<8x128xf32>
    %58 = arith.mulf %51, %57 : vector<8x128xf32>
    %59 = arith.addf %35, %58 : vector<8x128xf32>
    %c1_26 = arith.constant 1 : index
    %c2_27 = arith.constant 2 : index
    %60 = memref.load %arg4[%c1_26, %c2_27] : memref<20x3xf32, #tpu.memory_space<smem>>
    %61 = vector.broadcast %60 : f32 to vector<8x128xf32>
    %62 = arith.mulf %51, %61 : vector<8x128xf32>
    %63 = arith.addf %39, %62 : vector<8x128xf32>
    %c0_28 = arith.constant 0 : index
    %c2_29 = arith.constant 2 : index
    %64 = memref.load %arg2[%c0_28, %c2_29] : memref<2x20xf32, #tpu.memory_space<smem>>
    %65 = vector.broadcast %64 : f32 to vector<8x128xf32>
    %66 = arith.mulf %4, %65 : vector<8x128xf32>
    %c1_30 = arith.constant 1 : index
    %c2_31 = arith.constant 2 : index
    %67 = memref.load %arg2[%c1_30, %c2_31] : memref<2x20xf32, #tpu.memory_space<smem>>
    %68 = vector.broadcast %67 : f32 to vector<8x128xf32>
    %69 = arith.mulf %5, %68 : vector<8x128xf32>
    %70 = arith.addf %66, %69 : vector<8x128xf32>
    %c2_32 = arith.constant 2 : index
    %71 = memref.load %arg3[%c2_32] : memref<20xf32, #tpu.memory_space<smem>>
    %72 = vector.broadcast %71 : f32 to vector<8x128xf32>
    %73 = arith.addf %70, %72 : vector<8x128xf32>
    %cst_33 = arith.constant 0.000000e+00 : f32
    %74 = vector.broadcast %cst_33 : f32 to vector<8x128xf32>
    %75 = arith.maximumf %73, %74 : vector<8x128xf32>
    %c2_34 = arith.constant 2 : index
    %c0_35 = arith.constant 0 : index
    %76 = memref.load %arg4[%c2_34, %c0_35] : memref<20x3xf32, #tpu.memory_space<smem>>
    %77 = vector.broadcast %76 : f32 to vector<8x128xf32>
    %78 = arith.mulf %75, %77 : vector<8x128xf32>
    %79 = arith.addf %55, %78 : vector<8x128xf32>
    %c2_36 = arith.constant 2 : index
    %c1_37 = arith.constant 1 : index
    %80 = memref.load %arg4[%c2_36, %c1_37] : memref<20x3xf32, #tpu.memory_space<smem>>
    %81 = vector.broadcast %80 : f32 to vector<8x128xf32>
    %82 = arith.mulf %75, %81 : vector<8x128xf32>
    %83 = arith.addf %59, %82 : vector<8x128xf32>
    %c2_38 = arith.constant 2 : index
    %c2_39 = arith.constant 2 : index
    %84 = memref.load %arg4[%c2_38, %c2_39] : memref<20x3xf32, #tpu.memory_space<smem>>
    %85 = vector.broadcast %84 : f32 to vector<8x128xf32>
    %86 = arith.mulf %75, %85 : vector<8x128xf32>
    %87 = arith.addf %63, %86 : vector<8x128xf32>
    %c0_40 = arith.constant 0 : index
    %c3 = arith.constant 3 : index
    %88 = memref.load %arg2[%c0_40, %c3] : memref<2x20xf32, #tpu.memory_space<smem>>
    %89 = vector.broadcast %88 : f32 to vector<8x128xf32>
    %90 = arith.mulf %4, %89 : vector<8x128xf32>
    %c1_41 = arith.constant 1 : index
    %c3_42 = arith.constant 3 : index
    %91 = memref.load %arg2[%c1_41, %c3_42] : memref<2x20xf32, #tpu.memory_space<smem>>
    %92 = vector.broadcast %91 : f32 to vector<8x128xf32>
    %93 = arith.mulf %5, %92 : vector<8x128xf32>
    %94 = arith.addf %90, %93 : vector<8x128xf32>
    %c3_43 = arith.constant 3 : index
    %95 = memref.load %arg3[%c3_43] : memref<20xf32, #tpu.memory_space<smem>>
    %96 = vector.broadcast %95 : f32 to vector<8x128xf32>
    %97 = arith.addf %94, %96 : vector<8x128xf32>
    %cst_44 = arith.constant 0.000000e+00 : f32
    %98 = vector.broadcast %cst_44 : f32 to vector<8x128xf32>
    %99 = arith.maximumf %97, %98 : vector<8x128xf32>
    %c3_45 = arith.constant 3 : index
    %c0_46 = arith.constant 0 : index
    %100 = memref.load %arg4[%c3_45, %c0_46] : memref<20x3xf32, #tpu.memory_space<smem>>
    %101 = vector.broadcast %100 : f32 to vector<8x128xf32>
    %102 = arith.mulf %99, %101 : vector<8x128xf32>
    %103 = arith.addf %79, %102 : vector<8x128xf32>
    %c3_47 = arith.constant 3 : index
    %c1_48 = arith.constant 1 : index
    %104 = memref.load %arg4[%c3_47, %c1_48] : memref<20x3xf32, #tpu.memory_space<smem>>
    %105 = vector.broadcast %104 : f32 to vector<8x128xf32>
    %106 = arith.mulf %99, %105 : vector<8x128xf32>
    %107 = arith.addf %83, %106 : vector<8x128xf32>
    %c3_49 = arith.constant 3 : index
    %c2_50 = arith.constant 2 : index
    %108 = memref.load %arg4[%c3_49, %c2_50] : memref<20x3xf32, #tpu.memory_space<smem>>
    %109 = vector.broadcast %108 : f32 to vector<8x128xf32>
    %110 = arith.mulf %99, %109 : vector<8x128xf32>
    %111 = arith.addf %87, %110 : vector<8x128xf32>
    %c0_51 = arith.constant 0 : index
    %c4 = arith.constant 4 : index
    %112 = memref.load %arg2[%c0_51, %c4] : memref<2x20xf32, #tpu.memory_space<smem>>
    %113 = vector.broadcast %112 : f32 to vector<8x128xf32>
    %114 = arith.mulf %4, %113 : vector<8x128xf32>
    %c1_52 = arith.constant 1 : index
    %c4_53 = arith.constant 4 : index
    %115 = memref.load %arg2[%c1_52, %c4_53] : memref<2x20xf32, #tpu.memory_space<smem>>
    %116 = vector.broadcast %115 : f32 to vector<8x128xf32>
    %117 = arith.mulf %5, %116 : vector<8x128xf32>
    %118 = arith.addf %114, %117 : vector<8x128xf32>
    %c4_54 = arith.constant 4 : index
    %119 = memref.load %arg3[%c4_54] : memref<20xf32, #tpu.memory_space<smem>>
    %120 = vector.broadcast %119 : f32 to vector<8x128xf32>
    %121 = arith.addf %118, %120 : vector<8x128xf32>
    %cst_55 = arith.constant 0.000000e+00 : f32
    %122 = vector.broadcast %cst_55 : f32 to vector<8x128xf32>
    %123 = arith.maximumf %121, %122 : vector<8x128xf32>
    %c4_56 = arith.constant 4 : index
    %c0_57 = arith.constant 0 : index
    %124 = memref.load %arg4[%c4_56, %c0_57] : memref<20x3xf32, #tpu.memory_space<smem>>
    %125 = vector.broadcast %124 : f32 to vector<8x128xf32>
    %126 = arith.mulf %123, %125 : vector<8x128xf32>
    %127 = arith.addf %103, %126 : vector<8x128xf32>
    %c4_58 = arith.constant 4 : index
    %c1_59 = arith.constant 1 : index
    %128 = memref.load %arg4[%c4_58, %c1_59] : memref<20x3xf32, #tpu.memory_space<smem>>
    %129 = vector.broadcast %128 : f32 to vector<8x128xf32>
    %130 = arith.mulf %123, %129 : vector<8x128xf32>
    %131 = arith.addf %107, %130 : vector<8x128xf32>
    %c4_60 = arith.constant 4 : index
    %c2_61 = arith.constant 2 : index
    %132 = memref.load %arg4[%c4_60, %c2_61] : memref<20x3xf32, #tpu.memory_space<smem>>
    %133 = vector.broadcast %132 : f32 to vector<8x128xf32>
    %134 = arith.mulf %123, %133 : vector<8x128xf32>
    %135 = arith.addf %111, %134 : vector<8x128xf32>
    %c0_62 = arith.constant 0 : index
    %c5 = arith.constant 5 : index
    %136 = memref.load %arg2[%c0_62, %c5] : memref<2x20xf32, #tpu.memory_space<smem>>
    %137 = vector.broadcast %136 : f32 to vector<8x128xf32>
    %138 = arith.mulf %4, %137 : vector<8x128xf32>
    %c1_63 = arith.constant 1 : index
    %c5_64 = arith.constant 5 : index
    %139 = memref.load %arg2[%c1_63, %c5_64] : memref<2x20xf32, #tpu.memory_space<smem>>
    %140 = vector.broadcast %139 : f32 to vector<8x128xf32>
    %141 = arith.mulf %5, %140 : vector<8x128xf32>
    %142 = arith.addf %138, %141 : vector<8x128xf32>
    %c5_65 = arith.constant 5 : index
    %143 = memref.load %arg3[%c5_65] : memref<20xf32, #tpu.memory_space<smem>>
    %144 = vector.broadcast %143 : f32 to vector<8x128xf32>
    %145 = arith.addf %142, %144 : vector<8x128xf32>
    %cst_66 = arith.constant 0.000000e+00 : f32
    %146 = vector.broadcast %cst_66 : f32 to vector<8x128xf32>
    %147 = arith.maximumf %145, %146 : vector<8x128xf32>
    %c5_67 = arith.constant 5 : index
    %c0_68 = arith.constant 0 : index
    %148 = memref.load %arg4[%c5_67, %c0_68] : memref<20x3xf32, #tpu.memory_space<smem>>
    %149 = vector.broadcast %148 : f32 to vector<8x128xf32>
    %150 = arith.mulf %147, %149 : vector<8x128xf32>
    %151 = arith.addf %127, %150 : vector<8x128xf32>
    %c5_69 = arith.constant 5 : index
    %c1_70 = arith.constant 1 : index
    %152 = memref.load %arg4[%c5_69, %c1_70] : memref<20x3xf32, #tpu.memory_space<smem>>
    %153 = vector.broadcast %152 : f32 to vector<8x128xf32>
    %154 = arith.mulf %147, %153 : vector<8x128xf32>
    %155 = arith.addf %131, %154 : vector<8x128xf32>
    %c5_71 = arith.constant 5 : index
    %c2_72 = arith.constant 2 : index
    %156 = memref.load %arg4[%c5_71, %c2_72] : memref<20x3xf32, #tpu.memory_space<smem>>
    %157 = vector.broadcast %156 : f32 to vector<8x128xf32>
    %158 = arith.mulf %147, %157 : vector<8x128xf32>
    %159 = arith.addf %135, %158 : vector<8x128xf32>
    %c0_73 = arith.constant 0 : index
    %c6 = arith.constant 6 : index
    %160 = memref.load %arg2[%c0_73, %c6] : memref<2x20xf32, #tpu.memory_space<smem>>
    %161 = vector.broadcast %160 : f32 to vector<8x128xf32>
    %162 = arith.mulf %4, %161 : vector<8x128xf32>
    %c1_74 = arith.constant 1 : index
    %c6_75 = arith.constant 6 : index
    %163 = memref.load %arg2[%c1_74, %c6_75] : memref<2x20xf32, #tpu.memory_space<smem>>
    %164 = vector.broadcast %163 : f32 to vector<8x128xf32>
    %165 = arith.mulf %5, %164 : vector<8x128xf32>
    %166 = arith.addf %162, %165 : vector<8x128xf32>
    %c6_76 = arith.constant 6 : index
    %167 = memref.load %arg3[%c6_76] : memref<20xf32, #tpu.memory_space<smem>>
    %168 = vector.broadcast %167 : f32 to vector<8x128xf32>
    %169 = arith.addf %166, %168 : vector<8x128xf32>
    %cst_77 = arith.constant 0.000000e+00 : f32
    %170 = vector.broadcast %cst_77 : f32 to vector<8x128xf32>
    %171 = arith.maximumf %169, %170 : vector<8x128xf32>
    %c6_78 = arith.constant 6 : index
    %c0_79 = arith.constant 0 : index
    %172 = memref.load %arg4[%c6_78, %c0_79] : memref<20x3xf32, #tpu.memory_space<smem>>
    %173 = vector.broadcast %172 : f32 to vector<8x128xf32>
    %174 = arith.mulf %171, %173 : vector<8x128xf32>
    %175 = arith.addf %151, %174 : vector<8x128xf32>
    %c6_80 = arith.constant 6 : index
    %c1_81 = arith.constant 1 : index
    %176 = memref.load %arg4[%c6_80, %c1_81] : memref<20x3xf32, #tpu.memory_space<smem>>
    %177 = vector.broadcast %176 : f32 to vector<8x128xf32>
    %178 = arith.mulf %171, %177 : vector<8x128xf32>
    %179 = arith.addf %155, %178 : vector<8x128xf32>
    %c6_82 = arith.constant 6 : index
    %c2_83 = arith.constant 2 : index
    %180 = memref.load %arg4[%c6_82, %c2_83] : memref<20x3xf32, #tpu.memory_space<smem>>
    %181 = vector.broadcast %180 : f32 to vector<8x128xf32>
    %182 = arith.mulf %171, %181 : vector<8x128xf32>
    %183 = arith.addf %159, %182 : vector<8x128xf32>
    %c0_84 = arith.constant 0 : index
    %c7 = arith.constant 7 : index
    %184 = memref.load %arg2[%c0_84, %c7] : memref<2x20xf32, #tpu.memory_space<smem>>
    %185 = vector.broadcast %184 : f32 to vector<8x128xf32>
    %186 = arith.mulf %4, %185 : vector<8x128xf32>
    %c1_85 = arith.constant 1 : index
    %c7_86 = arith.constant 7 : index
    %187 = memref.load %arg2[%c1_85, %c7_86] : memref<2x20xf32, #tpu.memory_space<smem>>
    %188 = vector.broadcast %187 : f32 to vector<8x128xf32>
    %189 = arith.mulf %5, %188 : vector<8x128xf32>
    %190 = arith.addf %186, %189 : vector<8x128xf32>
    %c7_87 = arith.constant 7 : index
    %191 = memref.load %arg3[%c7_87] : memref<20xf32, #tpu.memory_space<smem>>
    %192 = vector.broadcast %191 : f32 to vector<8x128xf32>
    %193 = arith.addf %190, %192 : vector<8x128xf32>
    %cst_88 = arith.constant 0.000000e+00 : f32
    %194 = vector.broadcast %cst_88 : f32 to vector<8x128xf32>
    %195 = arith.maximumf %193, %194 : vector<8x128xf32>
    %c7_89 = arith.constant 7 : index
    %c0_90 = arith.constant 0 : index
    %196 = memref.load %arg4[%c7_89, %c0_90] : memref<20x3xf32, #tpu.memory_space<smem>>
    %197 = vector.broadcast %196 : f32 to vector<8x128xf32>
    %198 = arith.mulf %195, %197 : vector<8x128xf32>
    %199 = arith.addf %175, %198 : vector<8x128xf32>
    %c7_91 = arith.constant 7 : index
    %c1_92 = arith.constant 1 : index
    %200 = memref.load %arg4[%c7_91, %c1_92] : memref<20x3xf32, #tpu.memory_space<smem>>
    %201 = vector.broadcast %200 : f32 to vector<8x128xf32>
    %202 = arith.mulf %195, %201 : vector<8x128xf32>
    %203 = arith.addf %179, %202 : vector<8x128xf32>
    %c7_93 = arith.constant 7 : index
    %c2_94 = arith.constant 2 : index
    %204 = memref.load %arg4[%c7_93, %c2_94] : memref<20x3xf32, #tpu.memory_space<smem>>
    %205 = vector.broadcast %204 : f32 to vector<8x128xf32>
    %206 = arith.mulf %195, %205 : vector<8x128xf32>
    %207 = arith.addf %183, %206 : vector<8x128xf32>
    %c0_95 = arith.constant 0 : index
    %c8 = arith.constant 8 : index
    %208 = memref.load %arg2[%c0_95, %c8] : memref<2x20xf32, #tpu.memory_space<smem>>
    %209 = vector.broadcast %208 : f32 to vector<8x128xf32>
    %210 = arith.mulf %4, %209 : vector<8x128xf32>
    %c1_96 = arith.constant 1 : index
    %c8_97 = arith.constant 8 : index
    %211 = memref.load %arg2[%c1_96, %c8_97] : memref<2x20xf32, #tpu.memory_space<smem>>
    %212 = vector.broadcast %211 : f32 to vector<8x128xf32>
    %213 = arith.mulf %5, %212 : vector<8x128xf32>
    %214 = arith.addf %210, %213 : vector<8x128xf32>
    %c8_98 = arith.constant 8 : index
    %215 = memref.load %arg3[%c8_98] : memref<20xf32, #tpu.memory_space<smem>>
    %216 = vector.broadcast %215 : f32 to vector<8x128xf32>
    %217 = arith.addf %214, %216 : vector<8x128xf32>
    %cst_99 = arith.constant 0.000000e+00 : f32
    %218 = vector.broadcast %cst_99 : f32 to vector<8x128xf32>
    %219 = arith.maximumf %217, %218 : vector<8x128xf32>
    %c8_100 = arith.constant 8 : index
    %c0_101 = arith.constant 0 : index
    %220 = memref.load %arg4[%c8_100, %c0_101] : memref<20x3xf32, #tpu.memory_space<smem>>
    %221 = vector.broadcast %220 : f32 to vector<8x128xf32>
    %222 = arith.mulf %219, %221 : vector<8x128xf32>
    %223 = arith.addf %199, %222 : vector<8x128xf32>
    %c8_102 = arith.constant 8 : index
    %c1_103 = arith.constant 1 : index
    %224 = memref.load %arg4[%c8_102, %c1_103] : memref<20x3xf32, #tpu.memory_space<smem>>
    %225 = vector.broadcast %224 : f32 to vector<8x128xf32>
    %226 = arith.mulf %219, %225 : vector<8x128xf32>
    %227 = arith.addf %203, %226 : vector<8x128xf32>
    %c8_104 = arith.constant 8 : index
    %c2_105 = arith.constant 2 : index
    %228 = memref.load %arg4[%c8_104, %c2_105] : memref<20x3xf32, #tpu.memory_space<smem>>
    %229 = vector.broadcast %228 : f32 to vector<8x128xf32>
    %230 = arith.mulf %219, %229 : vector<8x128xf32>
    %231 = arith.addf %207, %230 : vector<8x128xf32>
    %c0_106 = arith.constant 0 : index
    %c9 = arith.constant 9 : index
    %232 = memref.load %arg2[%c0_106, %c9] : memref<2x20xf32, #tpu.memory_space<smem>>
    %233 = vector.broadcast %232 : f32 to vector<8x128xf32>
    %234 = arith.mulf %4, %233 : vector<8x128xf32>
    %c1_107 = arith.constant 1 : index
    %c9_108 = arith.constant 9 : index
    %235 = memref.load %arg2[%c1_107, %c9_108] : memref<2x20xf32, #tpu.memory_space<smem>>
    %236 = vector.broadcast %235 : f32 to vector<8x128xf32>
    %237 = arith.mulf %5, %236 : vector<8x128xf32>
    %238 = arith.addf %234, %237 : vector<8x128xf32>
    %c9_109 = arith.constant 9 : index
    %239 = memref.load %arg3[%c9_109] : memref<20xf32, #tpu.memory_space<smem>>
    %240 = vector.broadcast %239 : f32 to vector<8x128xf32>
    %241 = arith.addf %238, %240 : vector<8x128xf32>
    %cst_110 = arith.constant 0.000000e+00 : f32
    %242 = vector.broadcast %cst_110 : f32 to vector<8x128xf32>
    %243 = arith.maximumf %241, %242 : vector<8x128xf32>
    %c9_111 = arith.constant 9 : index
    %c0_112 = arith.constant 0 : index
    %244 = memref.load %arg4[%c9_111, %c0_112] : memref<20x3xf32, #tpu.memory_space<smem>>
    %245 = vector.broadcast %244 : f32 to vector<8x128xf32>
    %246 = arith.mulf %243, %245 : vector<8x128xf32>
    %247 = arith.addf %223, %246 : vector<8x128xf32>
    %c9_113 = arith.constant 9 : index
    %c1_114 = arith.constant 1 : index
    %248 = memref.load %arg4[%c9_113, %c1_114] : memref<20x3xf32, #tpu.memory_space<smem>>
    %249 = vector.broadcast %248 : f32 to vector<8x128xf32>
    %250 = arith.mulf %243, %249 : vector<8x128xf32>
    %251 = arith.addf %227, %250 : vector<8x128xf32>
    %c9_115 = arith.constant 9 : index
    %c2_116 = arith.constant 2 : index
    %252 = memref.load %arg4[%c9_115, %c2_116] : memref<20x3xf32, #tpu.memory_space<smem>>
    %253 = vector.broadcast %252 : f32 to vector<8x128xf32>
    %254 = arith.mulf %243, %253 : vector<8x128xf32>
    %255 = arith.addf %231, %254 : vector<8x128xf32>
    %c0_117 = arith.constant 0 : index
    %c10 = arith.constant 10 : index
    %256 = memref.load %arg2[%c0_117, %c10] : memref<2x20xf32, #tpu.memory_space<smem>>
    %257 = vector.broadcast %256 : f32 to vector<8x128xf32>
    %258 = arith.mulf %4, %257 : vector<8x128xf32>
    %c1_118 = arith.constant 1 : index
    %c10_119 = arith.constant 10 : index
    %259 = memref.load %arg2[%c1_118, %c10_119] : memref<2x20xf32, #tpu.memory_space<smem>>
    %260 = vector.broadcast %259 : f32 to vector<8x128xf32>
    %261 = arith.mulf %5, %260 : vector<8x128xf32>
    %262 = arith.addf %258, %261 : vector<8x128xf32>
    %c10_120 = arith.constant 10 : index
    %263 = memref.load %arg3[%c10_120] : memref<20xf32, #tpu.memory_space<smem>>
    %264 = vector.broadcast %263 : f32 to vector<8x128xf32>
    %265 = arith.addf %262, %264 : vector<8x128xf32>
    %cst_121 = arith.constant 0.000000e+00 : f32
    %266 = vector.broadcast %cst_121 : f32 to vector<8x128xf32>
    %267 = arith.maximumf %265, %266 : vector<8x128xf32>
    %c10_122 = arith.constant 10 : index
    %c0_123 = arith.constant 0 : index
    %268 = memref.load %arg4[%c10_122, %c0_123] : memref<20x3xf32, #tpu.memory_space<smem>>
    %269 = vector.broadcast %268 : f32 to vector<8x128xf32>
    %270 = arith.mulf %267, %269 : vector<8x128xf32>
    %271 = arith.addf %247, %270 : vector<8x128xf32>
    %c10_124 = arith.constant 10 : index
    %c1_125 = arith.constant 1 : index
    %272 = memref.load %arg4[%c10_124, %c1_125] : memref<20x3xf32, #tpu.memory_space<smem>>
    %273 = vector.broadcast %272 : f32 to vector<8x128xf32>
    %274 = arith.mulf %267, %273 : vector<8x128xf32>
    %275 = arith.addf %251, %274 : vector<8x128xf32>
    %c10_126 = arith.constant 10 : index
    %c2_127 = arith.constant 2 : index
    %276 = memref.load %arg4[%c10_126, %c2_127] : memref<20x3xf32, #tpu.memory_space<smem>>
    %277 = vector.broadcast %276 : f32 to vector<8x128xf32>
    %278 = arith.mulf %267, %277 : vector<8x128xf32>
    %279 = arith.addf %255, %278 : vector<8x128xf32>
    %c0_128 = arith.constant 0 : index
    %c11 = arith.constant 11 : index
    %280 = memref.load %arg2[%c0_128, %c11] : memref<2x20xf32, #tpu.memory_space<smem>>
    %281 = vector.broadcast %280 : f32 to vector<8x128xf32>
    %282 = arith.mulf %4, %281 : vector<8x128xf32>
    %c1_129 = arith.constant 1 : index
    %c11_130 = arith.constant 11 : index
    %283 = memref.load %arg2[%c1_129, %c11_130] : memref<2x20xf32, #tpu.memory_space<smem>>
    %284 = vector.broadcast %283 : f32 to vector<8x128xf32>
    %285 = arith.mulf %5, %284 : vector<8x128xf32>
    %286 = arith.addf %282, %285 : vector<8x128xf32>
    %c11_131 = arith.constant 11 : index
    %287 = memref.load %arg3[%c11_131] : memref<20xf32, #tpu.memory_space<smem>>
    %288 = vector.broadcast %287 : f32 to vector<8x128xf32>
    %289 = arith.addf %286, %288 : vector<8x128xf32>
    %cst_132 = arith.constant 0.000000e+00 : f32
    %290 = vector.broadcast %cst_132 : f32 to vector<8x128xf32>
    %291 = arith.maximumf %289, %290 : vector<8x128xf32>
    %c11_133 = arith.constant 11 : index
    %c0_134 = arith.constant 0 : index
    %292 = memref.load %arg4[%c11_133, %c0_134] : memref<20x3xf32, #tpu.memory_space<smem>>
    %293 = vector.broadcast %292 : f32 to vector<8x128xf32>
    %294 = arith.mulf %291, %293 : vector<8x128xf32>
    %295 = arith.addf %271, %294 : vector<8x128xf32>
    %c11_135 = arith.constant 11 : index
    %c1_136 = arith.constant 1 : index
    %296 = memref.load %arg4[%c11_135, %c1_136] : memref<20x3xf32, #tpu.memory_space<smem>>
    %297 = vector.broadcast %296 : f32 to vector<8x128xf32>
    %298 = arith.mulf %291, %297 : vector<8x128xf32>
    %299 = arith.addf %275, %298 : vector<8x128xf32>
    %c11_137 = arith.constant 11 : index
    %c2_138 = arith.constant 2 : index
    %300 = memref.load %arg4[%c11_137, %c2_138] : memref<20x3xf32, #tpu.memory_space<smem>>
    %301 = vector.broadcast %300 : f32 to vector<8x128xf32>
    %302 = arith.mulf %291, %301 : vector<8x128xf32>
    %303 = arith.addf %279, %302 : vector<8x128xf32>
    %c0_139 = arith.constant 0 : index
    %c12 = arith.constant 12 : index
    %304 = memref.load %arg2[%c0_139, %c12] : memref<2x20xf32, #tpu.memory_space<smem>>
    %305 = vector.broadcast %304 : f32 to vector<8x128xf32>
    %306 = arith.mulf %4, %305 : vector<8x128xf32>
    %c1_140 = arith.constant 1 : index
    %c12_141 = arith.constant 12 : index
    %307 = memref.load %arg2[%c1_140, %c12_141] : memref<2x20xf32, #tpu.memory_space<smem>>
    %308 = vector.broadcast %307 : f32 to vector<8x128xf32>
    %309 = arith.mulf %5, %308 : vector<8x128xf32>
    %310 = arith.addf %306, %309 : vector<8x128xf32>
    %c12_142 = arith.constant 12 : index
    %311 = memref.load %arg3[%c12_142] : memref<20xf32, #tpu.memory_space<smem>>
    %312 = vector.broadcast %311 : f32 to vector<8x128xf32>
    %313 = arith.addf %310, %312 : vector<8x128xf32>
    %cst_143 = arith.constant 0.000000e+00 : f32
    %314 = vector.broadcast %cst_143 : f32 to vector<8x128xf32>
    %315 = arith.maximumf %313, %314 : vector<8x128xf32>
    %c12_144 = arith.constant 12 : index
    %c0_145 = arith.constant 0 : index
    %316 = memref.load %arg4[%c12_144, %c0_145] : memref<20x3xf32, #tpu.memory_space<smem>>
    %317 = vector.broadcast %316 : f32 to vector<8x128xf32>
    %318 = arith.mulf %315, %317 : vector<8x128xf32>
    %319 = arith.addf %295, %318 : vector<8x128xf32>
    %c12_146 = arith.constant 12 : index
    %c1_147 = arith.constant 1 : index
    %320 = memref.load %arg4[%c12_146, %c1_147] : memref<20x3xf32, #tpu.memory_space<smem>>
    %321 = vector.broadcast %320 : f32 to vector<8x128xf32>
    %322 = arith.mulf %315, %321 : vector<8x128xf32>
    %323 = arith.addf %299, %322 : vector<8x128xf32>
    %c12_148 = arith.constant 12 : index
    %c2_149 = arith.constant 2 : index
    %324 = memref.load %arg4[%c12_148, %c2_149] : memref<20x3xf32, #tpu.memory_space<smem>>
    %325 = vector.broadcast %324 : f32 to vector<8x128xf32>
    %326 = arith.mulf %315, %325 : vector<8x128xf32>
    %327 = arith.addf %303, %326 : vector<8x128xf32>
    %c0_150 = arith.constant 0 : index
    %c13 = arith.constant 13 : index
    %328 = memref.load %arg2[%c0_150, %c13] : memref<2x20xf32, #tpu.memory_space<smem>>
    %329 = vector.broadcast %328 : f32 to vector<8x128xf32>
    %330 = arith.mulf %4, %329 : vector<8x128xf32>
    %c1_151 = arith.constant 1 : index
    %c13_152 = arith.constant 13 : index
    %331 = memref.load %arg2[%c1_151, %c13_152] : memref<2x20xf32, #tpu.memory_space<smem>>
    %332 = vector.broadcast %331 : f32 to vector<8x128xf32>
    %333 = arith.mulf %5, %332 : vector<8x128xf32>
    %334 = arith.addf %330, %333 : vector<8x128xf32>
    %c13_153 = arith.constant 13 : index
    %335 = memref.load %arg3[%c13_153] : memref<20xf32, #tpu.memory_space<smem>>
    %336 = vector.broadcast %335 : f32 to vector<8x128xf32>
    %337 = arith.addf %334, %336 : vector<8x128xf32>
    %cst_154 = arith.constant 0.000000e+00 : f32
    %338 = vector.broadcast %cst_154 : f32 to vector<8x128xf32>
    %339 = arith.maximumf %337, %338 : vector<8x128xf32>
    %c13_155 = arith.constant 13 : index
    %c0_156 = arith.constant 0 : index
    %340 = memref.load %arg4[%c13_155, %c0_156] : memref<20x3xf32, #tpu.memory_space<smem>>
    %341 = vector.broadcast %340 : f32 to vector<8x128xf32>
    %342 = arith.mulf %339, %341 : vector<8x128xf32>
    %343 = arith.addf %319, %342 : vector<8x128xf32>
    %c13_157 = arith.constant 13 : index
    %c1_158 = arith.constant 1 : index
    %344 = memref.load %arg4[%c13_157, %c1_158] : memref<20x3xf32, #tpu.memory_space<smem>>
    %345 = vector.broadcast %344 : f32 to vector<8x128xf32>
    %346 = arith.mulf %339, %345 : vector<8x128xf32>
    %347 = arith.addf %323, %346 : vector<8x128xf32>
    %c13_159 = arith.constant 13 : index
    %c2_160 = arith.constant 2 : index
    %348 = memref.load %arg4[%c13_159, %c2_160] : memref<20x3xf32, #tpu.memory_space<smem>>
    %349 = vector.broadcast %348 : f32 to vector<8x128xf32>
    %350 = arith.mulf %339, %349 : vector<8x128xf32>
    %351 = arith.addf %327, %350 : vector<8x128xf32>
    %c0_161 = arith.constant 0 : index
    %c14 = arith.constant 14 : index
    %352 = memref.load %arg2[%c0_161, %c14] : memref<2x20xf32, #tpu.memory_space<smem>>
    %353 = vector.broadcast %352 : f32 to vector<8x128xf32>
    %354 = arith.mulf %4, %353 : vector<8x128xf32>
    %c1_162 = arith.constant 1 : index
    %c14_163 = arith.constant 14 : index
    %355 = memref.load %arg2[%c1_162, %c14_163] : memref<2x20xf32, #tpu.memory_space<smem>>
    %356 = vector.broadcast %355 : f32 to vector<8x128xf32>
    %357 = arith.mulf %5, %356 : vector<8x128xf32>
    %358 = arith.addf %354, %357 : vector<8x128xf32>
    %c14_164 = arith.constant 14 : index
    %359 = memref.load %arg3[%c14_164] : memref<20xf32, #tpu.memory_space<smem>>
    %360 = vector.broadcast %359 : f32 to vector<8x128xf32>
    %361 = arith.addf %358, %360 : vector<8x128xf32>
    %cst_165 = arith.constant 0.000000e+00 : f32
    %362 = vector.broadcast %cst_165 : f32 to vector<8x128xf32>
    %363 = arith.maximumf %361, %362 : vector<8x128xf32>
    %c14_166 = arith.constant 14 : index
    %c0_167 = arith.constant 0 : index
    %364 = memref.load %arg4[%c14_166, %c0_167] : memref<20x3xf32, #tpu.memory_space<smem>>
    %365 = vector.broadcast %364 : f32 to vector<8x128xf32>
    %366 = arith.mulf %363, %365 : vector<8x128xf32>
    %367 = arith.addf %343, %366 : vector<8x128xf32>
    %c14_168 = arith.constant 14 : index
    %c1_169 = arith.constant 1 : index
    %368 = memref.load %arg4[%c14_168, %c1_169] : memref<20x3xf32, #tpu.memory_space<smem>>
    %369 = vector.broadcast %368 : f32 to vector<8x128xf32>
    %370 = arith.mulf %363, %369 : vector<8x128xf32>
    %371 = arith.addf %347, %370 : vector<8x128xf32>
    %c14_170 = arith.constant 14 : index
    %c2_171 = arith.constant 2 : index
    %372 = memref.load %arg4[%c14_170, %c2_171] : memref<20x3xf32, #tpu.memory_space<smem>>
    %373 = vector.broadcast %372 : f32 to vector<8x128xf32>
    %374 = arith.mulf %363, %373 : vector<8x128xf32>
    %375 = arith.addf %351, %374 : vector<8x128xf32>
    %c0_172 = arith.constant 0 : index
    %c15 = arith.constant 15 : index
    %376 = memref.load %arg2[%c0_172, %c15] : memref<2x20xf32, #tpu.memory_space<smem>>
    %377 = vector.broadcast %376 : f32 to vector<8x128xf32>
    %378 = arith.mulf %4, %377 : vector<8x128xf32>
    %c1_173 = arith.constant 1 : index
    %c15_174 = arith.constant 15 : index
    %379 = memref.load %arg2[%c1_173, %c15_174] : memref<2x20xf32, #tpu.memory_space<smem>>
    %380 = vector.broadcast %379 : f32 to vector<8x128xf32>
    %381 = arith.mulf %5, %380 : vector<8x128xf32>
    %382 = arith.addf %378, %381 : vector<8x128xf32>
    %c15_175 = arith.constant 15 : index
    %383 = memref.load %arg3[%c15_175] : memref<20xf32, #tpu.memory_space<smem>>
    %384 = vector.broadcast %383 : f32 to vector<8x128xf32>
    %385 = arith.addf %382, %384 : vector<8x128xf32>
    %cst_176 = arith.constant 0.000000e+00 : f32
    %386 = vector.broadcast %cst_176 : f32 to vector<8x128xf32>
    %387 = arith.maximumf %385, %386 : vector<8x128xf32>
    %c15_177 = arith.constant 15 : index
    %c0_178 = arith.constant 0 : index
    %388 = memref.load %arg4[%c15_177, %c0_178] : memref<20x3xf32, #tpu.memory_space<smem>>
    %389 = vector.broadcast %388 : f32 to vector<8x128xf32>
    %390 = arith.mulf %387, %389 : vector<8x128xf32>
    %391 = arith.addf %367, %390 : vector<8x128xf32>
    %c15_179 = arith.constant 15 : index
    %c1_180 = arith.constant 1 : index
    %392 = memref.load %arg4[%c15_179, %c1_180] : memref<20x3xf32, #tpu.memory_space<smem>>
    %393 = vector.broadcast %392 : f32 to vector<8x128xf32>
    %394 = arith.mulf %387, %393 : vector<8x128xf32>
    %395 = arith.addf %371, %394 : vector<8x128xf32>
    %c15_181 = arith.constant 15 : index
    %c2_182 = arith.constant 2 : index
    %396 = memref.load %arg4[%c15_181, %c2_182] : memref<20x3xf32, #tpu.memory_space<smem>>
    %397 = vector.broadcast %396 : f32 to vector<8x128xf32>
    %398 = arith.mulf %387, %397 : vector<8x128xf32>
    %399 = arith.addf %375, %398 : vector<8x128xf32>
    %c0_183 = arith.constant 0 : index
    %c16 = arith.constant 16 : index
    %400 = memref.load %arg2[%c0_183, %c16] : memref<2x20xf32, #tpu.memory_space<smem>>
    %401 = vector.broadcast %400 : f32 to vector<8x128xf32>
    %402 = arith.mulf %4, %401 : vector<8x128xf32>
    %c1_184 = arith.constant 1 : index
    %c16_185 = arith.constant 16 : index
    %403 = memref.load %arg2[%c1_184, %c16_185] : memref<2x20xf32, #tpu.memory_space<smem>>
    %404 = vector.broadcast %403 : f32 to vector<8x128xf32>
    %405 = arith.mulf %5, %404 : vector<8x128xf32>
    %406 = arith.addf %402, %405 : vector<8x128xf32>
    %c16_186 = arith.constant 16 : index
    %407 = memref.load %arg3[%c16_186] : memref<20xf32, #tpu.memory_space<smem>>
    %408 = vector.broadcast %407 : f32 to vector<8x128xf32>
    %409 = arith.addf %406, %408 : vector<8x128xf32>
    %cst_187 = arith.constant 0.000000e+00 : f32
    %410 = vector.broadcast %cst_187 : f32 to vector<8x128xf32>
    %411 = arith.maximumf %409, %410 : vector<8x128xf32>
    %c16_188 = arith.constant 16 : index
    %c0_189 = arith.constant 0 : index
    %412 = memref.load %arg4[%c16_188, %c0_189] : memref<20x3xf32, #tpu.memory_space<smem>>
    %413 = vector.broadcast %412 : f32 to vector<8x128xf32>
    %414 = arith.mulf %411, %413 : vector<8x128xf32>
    %415 = arith.addf %391, %414 : vector<8x128xf32>
    %c16_190 = arith.constant 16 : index
    %c1_191 = arith.constant 1 : index
    %416 = memref.load %arg4[%c16_190, %c1_191] : memref<20x3xf32, #tpu.memory_space<smem>>
    %417 = vector.broadcast %416 : f32 to vector<8x128xf32>
    %418 = arith.mulf %411, %417 : vector<8x128xf32>
    %419 = arith.addf %395, %418 : vector<8x128xf32>
    %c16_192 = arith.constant 16 : index
    %c2_193 = arith.constant 2 : index
    %420 = memref.load %arg4[%c16_192, %c2_193] : memref<20x3xf32, #tpu.memory_space<smem>>
    %421 = vector.broadcast %420 : f32 to vector<8x128xf32>
    %422 = arith.mulf %411, %421 : vector<8x128xf32>
    %423 = arith.addf %399, %422 : vector<8x128xf32>
    %c0_194 = arith.constant 0 : index
    %c17 = arith.constant 17 : index
    %424 = memref.load %arg2[%c0_194, %c17] : memref<2x20xf32, #tpu.memory_space<smem>>
    %425 = vector.broadcast %424 : f32 to vector<8x128xf32>
    %426 = arith.mulf %4, %425 : vector<8x128xf32>
    %c1_195 = arith.constant 1 : index
    %c17_196 = arith.constant 17 : index
    %427 = memref.load %arg2[%c1_195, %c17_196] : memref<2x20xf32, #tpu.memory_space<smem>>
    %428 = vector.broadcast %427 : f32 to vector<8x128xf32>
    %429 = arith.mulf %5, %428 : vector<8x128xf32>
    %430 = arith.addf %426, %429 : vector<8x128xf32>
    %c17_197 = arith.constant 17 : index
    %431 = memref.load %arg3[%c17_197] : memref<20xf32, #tpu.memory_space<smem>>
    %432 = vector.broadcast %431 : f32 to vector<8x128xf32>
    %433 = arith.addf %430, %432 : vector<8x128xf32>
    %cst_198 = arith.constant 0.000000e+00 : f32
    %434 = vector.broadcast %cst_198 : f32 to vector<8x128xf32>
    %435 = arith.maximumf %433, %434 : vector<8x128xf32>
    %c17_199 = arith.constant 17 : index
    %c0_200 = arith.constant 0 : index
    %436 = memref.load %arg4[%c17_199, %c0_200] : memref<20x3xf32, #tpu.memory_space<smem>>
    %437 = vector.broadcast %436 : f32 to vector<8x128xf32>
    %438 = arith.mulf %435, %437 : vector<8x128xf32>
    %439 = arith.addf %415, %438 : vector<8x128xf32>
    %c17_201 = arith.constant 17 : index
    %c1_202 = arith.constant 1 : index
    %440 = memref.load %arg4[%c17_201, %c1_202] : memref<20x3xf32, #tpu.memory_space<smem>>
    %441 = vector.broadcast %440 : f32 to vector<8x128xf32>
    %442 = arith.mulf %435, %441 : vector<8x128xf32>
    %443 = arith.addf %419, %442 : vector<8x128xf32>
    %c17_203 = arith.constant 17 : index
    %c2_204 = arith.constant 2 : index
    %444 = memref.load %arg4[%c17_203, %c2_204] : memref<20x3xf32, #tpu.memory_space<smem>>
    %445 = vector.broadcast %444 : f32 to vector<8x128xf32>
    %446 = arith.mulf %435, %445 : vector<8x128xf32>
    %447 = arith.addf %423, %446 : vector<8x128xf32>
    %c0_205 = arith.constant 0 : index
    %c18 = arith.constant 18 : index
    %448 = memref.load %arg2[%c0_205, %c18] : memref<2x20xf32, #tpu.memory_space<smem>>
    %449 = vector.broadcast %448 : f32 to vector<8x128xf32>
    %450 = arith.mulf %4, %449 : vector<8x128xf32>
    %c1_206 = arith.constant 1 : index
    %c18_207 = arith.constant 18 : index
    %451 = memref.load %arg2[%c1_206, %c18_207] : memref<2x20xf32, #tpu.memory_space<smem>>
    %452 = vector.broadcast %451 : f32 to vector<8x128xf32>
    %453 = arith.mulf %5, %452 : vector<8x128xf32>
    %454 = arith.addf %450, %453 : vector<8x128xf32>
    %c18_208 = arith.constant 18 : index
    %455 = memref.load %arg3[%c18_208] : memref<20xf32, #tpu.memory_space<smem>>
    %456 = vector.broadcast %455 : f32 to vector<8x128xf32>
    %457 = arith.addf %454, %456 : vector<8x128xf32>
    %cst_209 = arith.constant 0.000000e+00 : f32
    %458 = vector.broadcast %cst_209 : f32 to vector<8x128xf32>
    %459 = arith.maximumf %457, %458 : vector<8x128xf32>
    %c18_210 = arith.constant 18 : index
    %c0_211 = arith.constant 0 : index
    %460 = memref.load %arg4[%c18_210, %c0_211] : memref<20x3xf32, #tpu.memory_space<smem>>
    %461 = vector.broadcast %460 : f32 to vector<8x128xf32>
    %462 = arith.mulf %459, %461 : vector<8x128xf32>
    %463 = arith.addf %439, %462 : vector<8x128xf32>
    %c18_212 = arith.constant 18 : index
    %c1_213 = arith.constant 1 : index
    %464 = memref.load %arg4[%c18_212, %c1_213] : memref<20x3xf32, #tpu.memory_space<smem>>
    %465 = vector.broadcast %464 : f32 to vector<8x128xf32>
    %466 = arith.mulf %459, %465 : vector<8x128xf32>
    %467 = arith.addf %443, %466 : vector<8x128xf32>
    %c18_214 = arith.constant 18 : index
    %c2_215 = arith.constant 2 : index
    %468 = memref.load %arg4[%c18_214, %c2_215] : memref<20x3xf32, #tpu.memory_space<smem>>
    %469 = vector.broadcast %468 : f32 to vector<8x128xf32>
    %470 = arith.mulf %459, %469 : vector<8x128xf32>
    %471 = arith.addf %447, %470 : vector<8x128xf32>
    %c0_216 = arith.constant 0 : index
    %c19 = arith.constant 19 : index
    %472 = memref.load %arg2[%c0_216, %c19] : memref<2x20xf32, #tpu.memory_space<smem>>
    %473 = vector.broadcast %472 : f32 to vector<8x128xf32>
    %474 = arith.mulf %4, %473 : vector<8x128xf32>
    %c1_217 = arith.constant 1 : index
    %c19_218 = arith.constant 19 : index
    %475 = memref.load %arg2[%c1_217, %c19_218] : memref<2x20xf32, #tpu.memory_space<smem>>
    %476 = vector.broadcast %475 : f32 to vector<8x128xf32>
    %477 = arith.mulf %5, %476 : vector<8x128xf32>
    %478 = arith.addf %474, %477 : vector<8x128xf32>
    %c19_219 = arith.constant 19 : index
    %479 = memref.load %arg3[%c19_219] : memref<20xf32, #tpu.memory_space<smem>>
    %480 = vector.broadcast %479 : f32 to vector<8x128xf32>
    %481 = arith.addf %478, %480 : vector<8x128xf32>
    %cst_220 = arith.constant 0.000000e+00 : f32
    %482 = vector.broadcast %cst_220 : f32 to vector<8x128xf32>
    %483 = arith.maximumf %481, %482 : vector<8x128xf32>
    %c19_221 = arith.constant 19 : index
    %c0_222 = arith.constant 0 : index
    %484 = memref.load %arg4[%c19_221, %c0_222] : memref<20x3xf32, #tpu.memory_space<smem>>
    %485 = vector.broadcast %484 : f32 to vector<8x128xf32>
    %486 = arith.mulf %483, %485 : vector<8x128xf32>
    %487 = arith.addf %463, %486 : vector<8x128xf32>
    %c19_223 = arith.constant 19 : index
    %c1_224 = arith.constant 1 : index
    %488 = memref.load %arg4[%c19_223, %c1_224] : memref<20x3xf32, #tpu.memory_space<smem>>
    %489 = vector.broadcast %488 : f32 to vector<8x128xf32>
    %490 = arith.mulf %483, %489 : vector<8x128xf32>
    %491 = arith.addf %467, %490 : vector<8x128xf32>
    %c19_225 = arith.constant 19 : index
    %c2_226 = arith.constant 2 : index
    %492 = memref.load %arg4[%c19_225, %c2_226] : memref<20x3xf32, #tpu.memory_space<smem>>
    %493 = vector.broadcast %492 : f32 to vector<8x128xf32>
    %494 = arith.mulf %483, %493 : vector<8x128xf32>
    %495 = arith.addf %471, %494 : vector<8x128xf32>
    %c0_227 = arith.constant 0 : index
    %c0_228 = arith.constant 0 : index
    %c0_229 = arith.constant 0 : index
    %496 = vector.load %arg6[%c0_227, %c0_228, %c0_229] : memref<3x8x128xf32, #tpu.memory_space<vmem>>, vector<1x8x128xf32>
    %497 = vector.shape_cast %496 : vector<1x8x128xf32> to vector<8x128xf32>
    %498 = vector.shape_cast %487 : vector<8x128xf32> to vector<1x8x128xf32>
    tpu.vector_store %arg6[%c0_227, %c0_228, %c0_229], %498 {strides = array<i32>} : memref<3x8x128xf32, #tpu.memory_space<vmem>>, vector<1x8x128xf32>,
    %c1_230 = arith.constant 1 : index
    %c0_231 = arith.constant 0 : index
    %c0_232 = arith.constant 0 : index
    %499 = vector.load %arg6[%c1_230, %c0_231, %c0_232] : memref<3x8x128xf32, #tpu.memory_space<vmem>>, vector<1x8x128xf32>
    %500 = vector.shape_cast %499 : vector<1x8x128xf32> to vector<8x128xf32>
    %501 = vector.shape_cast %491 : vector<8x128xf32> to vector<1x8x128xf32>
    tpu.vector_store %arg6[%c1_230, %c0_231, %c0_232], %501 {strides = array<i32>} : memref<3x8x128xf32, #tpu.memory_space<vmem>>, vector<1x8x128xf32>,
    %c2_233 = arith.constant 2 : index
    %c0_234 = arith.constant 0 : index
    %c0_235 = arith.constant 0 : index
    %502 = vector.load %arg6[%c2_233, %c0_234, %c0_235] : memref<3x8x128xf32, #tpu.memory_space<vmem>>, vector<1x8x128xf32>
    %503 = vector.shape_cast %502 : vector<1x8x128xf32> to vector<8x128xf32>
    %504 = vector.shape_cast %495 : vector<8x128xf32> to vector<1x8x128xf32>
    tpu.vector_store %arg6[%c2_233, %c0_234, %c0_235], %504 {strides = array<i32>} : memref<3x8x128xf32, #tpu.memory_space<vmem>>, vector<1x8x128xf32>,
    return
  }
  func.func @transform_0(%arg0: i32) -> (i32, i32) {
    %c0_i32 = arith.constant 0 : i32
    %c0_i32_0 = arith.constant 0 : i32
    return %arg0, %c0_i32 : i32, i32
  }
  func.func @transform_1(%arg0: i32) -> (i32, i32) {
    %c0_i32 = arith.constant 0 : i32
    %c0_i32_0 = arith.constant 0 : i32
    %c0_i32_1 = arith.constant 0 : i32
    return %c0_i32, %c0_i32_0 : i32, i32
  }
  func.func @transform_2(%arg0: i32) -> i32 {
    %c0_i32 = arith.constant 0 : i32
    %c0_i32_0 = arith.constant 0 : i32
    return %c0_i32 : i32
  }
  func.func @transform_3(%arg0: i32) -> (i32, i32) {
    %c0_i32 = arith.constant 0 : i32
    %c0_i32_0 = arith.constant 0 : i32
    %c0_i32_1 = arith.constant 0 : i32
    return %c0_i32, %c0_i32_0 : i32, i32
  }
  func.func @transform_4(%arg0: i32) -> i32 {
    %c0_i32 = arith.constant 0 : i32
    %c0_i32_0 = arith.constant 0 : i32
    return %c0_i32 : i32
  }
  func.func @transform_5(%arg0: i32) -> (i32, i32, i32) {
    %c0_i32 = arith.constant 0 : i32
    %c0_i32_0 = arith.constant 0 : i32
    %c0_i32_1 = arith.constant 0 : i32
    return %c0_i32, %arg0, %c0_i32_0 : i32, i32, i32
  }
}

</mosaic_0001>

<llo_original>
// kernel: tpu_custom_call.1
$region0: #{tpu_custom_call.1}
  #allocation0 [shape = 'u32[]', space=smem, size = 0x4, offset = 0x4, fixed_abs, tag = 'smem constant byte address 0x4 - core index']
  #allocation1 [shape = 'u32[144,128]{1,0:T(1,128)}', space=vmem, size = 0x12000, scoped, tag = 'internal scratch']
  %s0 = inlined_call_operand.vmem [shape: f32[8,128], index: 0, kind: input, shape index: {}]
  %s1 = inlined_call_operand.vmem [shape: f32[2,20], index: 1, kind: input, shape index: {}]
  %s2 = inlined_call_operand.vmem [shape: f32[20], index: 2, kind: input, shape index: {}]
  %s3 = inlined_call_operand.vmem [shape: f32[20,3], index: 3, kind: input, shape index: {}]
  %s4 = inlined_call_operand.vmem [shape: f32[3], index: 4, kind: input, shape index: {}]
  %s5 = inlined_call_operand.hbm [shape: f32[3,8,128], index: 5, kind: output, shape index: {}]
  %s6 = sld [smem:[#allocation0]]
  $region46: #{tpu_custom_call.1} parent=0
    _
  %s8 = ssub.s32 1, %s6
  %s9 = scalar_select 0, %s8, %s6
  $region1: #{tpu_custom_call.1} parent=0
    #allocation2 [shape = 'u8[1024]{0}', space=smem, size = 0x400, scoped, tag = 'input window, operand 1, single buffered']
    #allocation3 [shape = 's32[1]{0}', space=sflag, size = 0x4, scoped, tag = 'scoped memory for tpu_custom_call.1']
    #allocation4 [shape = 's32[1]{0}', space=sflag, size = 0x4, scoped, tag = 'scoped memory for tpu_custom_call.1']
    #allocation5 [shape = 'u8[512]{0}', space=smem, size = 0x200, scoped, tag = 'input window, operand 2, single buffered']
    #allocation6 [shape = 's32[1]{0}', space=sflag, size = 0x4, scoped, tag = 'scoped memory for tpu_custom_call.1']
    #allocation7 [shape = 'u8[12288]{0}', space=smem, size = 0x3000, scoped, tag = 'input window, operand 3, single buffered']
    #allocation8 [shape = 'u8[512]{0}', space=smem, size = 0x200, scoped, tag = 'input window, operand 4, single buffered']
    #allocation9 [shape = 's32[1]{0}', space=sflag, size = 0x4, scoped, tag = 'scoped memory for tpu_custom_call.1']
    #allocation10 [shape = 'u8[12288]{0}', space=vmem, size = 0x3000, scoped, tag = 'output window, operand 0, single buffered']
    %10 = vsyncpa [#allocation4], 0
    %11 = vsyncpa [#allocation6], 0
    %12 = vsyncpa [#allocation9], 0
    %13 = vsyncpa [#allocation3], 0
    // Predicated region
    $region2: #{tpu_custom_call.1} parent=1 // pred_check
      _
    $region3: #{tpu_custom_call.1} parent=1 // pred_check_branch
      %15 = sbr.rel (0) target = $region5
    $region4: #{tpu_custom_call.1} parent=1 // pred_region
      _
    $region5: #{tpu_custom_call.1} parent=1 // pred_fallthru
      _
    // Predicated region
    $region6: #{tpu_custom_call.1} parent=1 // pred_check
      _
    $region7: #{tpu_custom_call.1} parent=1 // pred_check_branch
      %17 = sbr.rel (0) target = $region9
    $region8: #{tpu_custom_call.1} parent=1 // pred_region
      %s19 = ssub.s32 32, 32
      %20 = vsyncadd [#allocation4], %s19
      %s22 = sshll.u32 %s1, 4
      %s23 = int_to_ptr.vmem [resolvable:$true] %s22
      %25 = dma.vmem_to_smem %s23, 32, [#allocation2], [#allocation4]
    $region9: #{tpu_custom_call.1} parent=1 // pred_fallthru
      _
    // Predicated region
    $region10: #{tpu_custom_call.1} parent=1 // pred_check
      _
    $region11: #{tpu_custom_call.1} parent=1 // pred_check_branch
      %27 = sbr.rel (0) target = $region13
    $region12: #{tpu_custom_call.1} parent=1 // pred_region
      %s29 = ssub.s32 16, 16
      %30 = vsyncadd [#allocation6], %s29
      %s32 = sshll.u32 %s2, 4
      %s33 = int_to_ptr.vmem [resolvable:$true] %s32
      %35 = dma.vmem_to_smem %s33, 16, [#allocation5], [#allocation6]
    $region13: #{tpu_custom_call.1} parent=1 // pred_fallthru
      _
    // Predicated region
    $region14: #{tpu_custom_call.1} parent=1 // pred_check
      _
    $region15: #{tpu_custom_call.1} parent=1 // pred_check_branch
      %37 = sbr.rel (0) target = $region17
    $region16: #{tpu_custom_call.1} parent=1 // pred_region
      %s39 = ssub.s32 384, 384
      %40 = vsyncadd [#allocation6], %s39
      %s41 = sshll.u32 %s3, 4
      %s42 = int_to_ptr.vmem [resolvable:$true] %s41
      %47 = dma.vmem_to_smem %s42, 384, [#allocation7], [#allocation6], 128, 128, 8
    $region17: #{tpu_custom_call.1} parent=1 // pred_fallthru
      _
    // Predicated region
    $region18: #{tpu_custom_call.1} parent=1 // pred_check
      _
    $region19: #{tpu_custom_call.1} parent=1 // pred_check_branch
      %49 = sbr.rel (0) target = $region21
    $region20: #{tpu_custom_call.1} parent=1 // pred_region
      %s51 = ssub.s32 16, 16
      %52 = vsyncadd [#allocation9], %s51
      %s54 = sshll.u32 %s4, 4
      %s55 = int_to_ptr.vmem [resolvable:$true] %s54
      %57 = dma.vmem_to_smem %s55, 16, [#allocation8], [#allocation9]
    $region21: #{tpu_custom_call.1} parent=1 // pred_fallthru
      _
    // Predicated region
    $region22: #{tpu_custom_call.1} parent=1 // pred_check
      _
    $region23: #{tpu_custom_call.1} parent=1 // pred_check_branch
      %59 = sbr.rel (0) target = $region25
    $region24: #{tpu_custom_call.1} parent=1 // pred_region
      %60 = dma.done [#allocation4], 32
    $region25: #{tpu_custom_call.1} parent=1 // pred_fallthru
      _
    // Predicated region
    $region26: #{tpu_custom_call.1} parent=1 // pred_check
      _
    $region27: #{tpu_custom_call.1} parent=1 // pred_check_branch
      %62 = sbr.rel (0) target = $region29
    $region28: #{tpu_custom_call.1} parent=1 // pred_region
      %63 = dma.done [#allocation6], 16
    $region29: #{tpu_custom_call.1} parent=1 // pred_fallthru
      _
    // Predicated region
    $region30: #{tpu_custom_call.1} parent=1 // pred_check
      _
    $region31: #{tpu_custom_call.1} parent=1 // pred_check_branch
      %65 = sbr.rel (0) target = $region33
    $region32: #{tpu_custom_call.1} parent=1 // pred_region
      %66 = dma.done [#allocation6], 384
    $region33: #{tpu_custom_call.1} parent=1 // pred_fallthru
      _
    // Predicated region
    $region34: #{tpu_custom_call.1} parent=1 // pred_check
      _
    $region35: #{tpu_custom_call.1} parent=1 // pred_check_branch
      %68 = sbr.rel (0) target = $region37
    $region36: #{tpu_custom_call.1} parent=1 // pred_region
      %69 = dma.done [#allocation9], 16
    $region37: #{tpu_custom_call.1} parent=1 // pred_fallthru
      _
    %70 = sfence
    %v71 = vld [vmem:[%s0] sm:$0xff]
    %v72 = vsub.f32 %v71, 22.5
    %v73 = vmul.f32 %v72, 0.011111111
    %v74 = vmul.f32 %v73, %v73
    %s75 = sld [smem:[#allocation8]]
    %v76 = vstv %s75
    %v77 = vadd.f32 %v76, 0.0
    %s78 = sld [smem:[#allocation8 + $0x1]]
    %v79 = vstv %s78
    %v80 = vadd.f32 %v79, 0.0
    %s81 = sld [smem:[#allocation8 + $0x2]]
    %v82 = vstv %s81
    %v83 = vadd.f32 %v82, 0.0
    %s84 = sld [smem:[#allocation2]]
    %v85 = vstv %s84
    %v86 = vmul.f32 %v73, %v85
    %s87 = sld [smem:[#allocation2 + $0x80]]
    %v88 = vstv %s87
    %v89 = vmul.f32 %v74, %v88
    %v90 = vadd.f32 %v86, %v89
    %s91 = sld [smem:[#allocation5]]
    %v92 = vstv %s91
    %v93 = vadd.f32 %v90, %v92
    %v94 = vmax.f32 %v93, 0.0
    %s95 = sld [smem:[#allocation7]]
    %v96 = vstv %s95
    %v97 = vmul.f32 %v94, %v96
    %v98 = vadd.f32 %v77, %v97
    %s99 = sld [smem:[#allocation7 + $0x1]]
    %v100 = vstv %s99
    %v101 = vmul.f32 %v94, %v100
    %v102 = vadd.f32 %v80, %v101
    %s103 = sld [smem:[#allocation7 + $0x2]]
    %v104 = vstv %s103
    %v105 = vmul.f32 %v94, %v104
    %v106 = vadd.f32 %v83, %v105
    %s107 = sld [smem:[#allocation2 + $0x1]]
    %v108 = vstv %s107
    %v109 = vmul.f32 %v73, %v108
    %s110 = sld [smem:[#allocation2 + $0x81]]
    %v111 = vstv %s110
    %v112 = vmul.f32 %v74, %v111
    %v113 = vadd.f32 %v109, %v112
    %s114 = sld [smem:[#allocation5 + $0x1]]
    %v115 = vstv %s114
    %v116 = vadd.f32 %v113, %v115
    %v117 = vmax.f32 %v116, 0.0
    %s118 = sld [smem:[#allocation7 + $0x80]]
    %v119 = vstv %s118
    %v120 = vmul.f32 %v117, %v119
    %v121 = vadd.f32 %v98, %v120
    %s122 = sld [smem:[#allocation7 + $0x81]]
    %v123 = vstv %s122
    %v124 = vmul.f32 %v117, %v123
    %v125 = vadd.f32 %v102, %v124
    %s126 = sld [smem:[#allocation7 + $0x82]]
    %v127 = vstv %s126
    %v128 = vmul.f32 %v117, %v127
    %v129 = vadd.f32 %v106, %v128
    %s130 = sld [smem:[#allocation2 + $0x2]]
    %v131 = vstv %s130
    %v132 = vmul.f32 %v73, %v131
    %s133 = sld [smem:[#allocation2 + $0x82]]
    %v134 = vstv %s133
    %v135 = vmul.f32 %v74, %v134
    %v136 = vadd.f32 %v132, %v135
    %s137 = sld [smem:[#allocation5 + $0x2]]
    %v138 = vstv %s137
    %v139 = vadd.f32 %v136, %v138
    %v140 = vmax.f32 %v139, 0.0
    %s141 = sld [smem:[#allocation7 + $0x100]]
    %v142 = vstv %s141
    %v143 = vmul.f32 %v140, %v142
    %v144 = vadd.f32 %v121, %v143
    %s145 = sld [smem:[#allocation7 + $0x101]]
    %v146 = vstv %s145
    %v147 = vmul.f32 %v140, %v146
    %v148 = vadd.f32 %v125, %v147
    %s149 = sld [smem:[#allocation7 + $0x102]]
    %v150 = vstv %s149
    %v151 = vmul.f32 %v140, %v150
    %v152 = vadd.f32 %v129, %v151
    %s153 = sld [smem:[#allocation2 + $0x3]]
    %v154 = vstv %s153
    %v155 = vmul.f32 %v73, %v154
    %s156 = sld [smem:[#allocation2 + $0x83]]
    %v157 = vstv %s156
    %v158 = vmul.f32 %v74, %v157
    %v159 = vadd.f32 %v155, %v158
    %s160 = sld [smem:[#allocation5 + $0x3]]
    %v161 = vstv %s160
    %v162 = vadd.f32 %v159, %v161
    %v163 = vmax.f32 %v162, 0.0
    %s164 = sld [smem:[#allocation7 + $0x180]]
    %v165 = vstv %s164
    %v166 = vmul.f32 %v163, %v165
    %v167 = vadd.f32 %v144, %v166
    %s168 = sld [smem:[#allocation7 + $0x181]]
    %v169 = vstv %s168
    %v170 = vmul.f32 %v163, %v169
    %v171 = vadd.f32 %v148, %v170
    %s172 = sld [smem:[#allocation7 + $0x182]]
    %v173 = vstv %s172
    %v174 = vmul.f32 %v163, %v173
    %v175 = vadd.f32 %v152, %v174
    %s176 = sld [smem:[#allocation2 + $0x4]]
    %v177 = vstv %s176
    %v178 = vmul.f32 %v73, %v177
    %s179 = sld [smem:[#allocation2 + $0x84]]
    %v180 = vstv %s179
    %v181 = vmul.f32 %v74, %v180
    %v182 = vadd.f32 %v178, %v181
    %s183 = sld [smem:[#allocation5 + $0x4]]
    %v184 = vstv %s183
    %v185 = vadd.f32 %v182, %v184
    %v186 = vmax.f32 %v185, 0.0
    %s187 = sld [smem:[#allocation7 + $0x200]]
    %v188 = vstv %s187
    %v189 = vmul.f32 %v186, %v188
    %v190 = vadd.f32 %v167, %v189
    %s191 = sld [smem:[#allocation7 + $0x201]]
    %v192 = vstv %s191
    %v193 = vmul.f32 %v186, %v192
    %v194 = vadd.f32 %v171, %v193
    %s195 = sld [smem:[#allocation7 + $0x202]]
    %v196 = vstv %s195
    %v197 = vmul.f32 %v186, %v196
    %v198 = vadd.f32 %v175, %v197
    %s199 = sld [smem:[#allocation2 + $0x5]]
    %v200 = vstv %s199
    %v201 = vmul.f32 %v73, %v200
    %s202 = sld [smem:[#allocation2 + $0x85]]
    %v203 = vstv %s202
    %v204 = vmul.f32 %v74, %v203
    %v205 = vadd.f32 %v201, %v204
    %s206 = sld [smem:[#allocation5 + $0x5]]
    %v207 = vstv %s206
    %v208 = vadd.f32 %v205, %v207
    %v209 = vmax.f32 %v208, 0.0
    %s210 = sld [smem:[#allocation7 + $0x280]]
    %v211 = vstv %s210
    %v212 = vmul.f32 %v209, %v211
    %v213 = vadd.f32 %v190, %v212
    %s214 = sld [smem:[#allocation7 + $0x281]]
    %v215 = vstv %s214
    %v216 = vmul.f32 %v209, %v215
    %v217 = vadd.f32 %v194, %v216
    %s218 = sld [smem:[#allocation7 + $0x282]]
    %v219 = vstv %s218
    %v220 = vmul.f32 %v209, %v219
    %v221 = vadd.f32 %v198, %v220
    %s222 = sld [smem:[#allocation2 + $0x6]]
    %v223 = vstv %s222
    %v224 = vmul.f32 %v73, %v223
    %s225 = sld [smem:[#allocation2 + $0x86]]
    %v226 = vstv %s225
    %v227 = vmul.f32 %v74, %v226
    %v228 = vadd.f32 %v224, %v227
    %s229 = sld [smem:[#allocation5 + $0x6]]
    %v230 = vstv %s229
    %v231 = vadd.f32 %v228, %v230
    %v232 = vmax.f32 %v231, 0.0
    %s233 = sld [smem:[#allocation7 + $0x300]]
    %v234 = vstv %s233
    %v235 = vmul.f32 %v232, %v234
    %v236 = vadd.f32 %v213, %v235
    %s237 = sld [smem:[#allocation7 + $0x301]]
    %v238 = vstv %s237
    %v239 = vmul.f32 %v232, %v238
    %v240 = vadd.f32 %v217, %v239
    %s241 = sld [smem:[#allocation7 + $0x302]]
    %v242 = vstv %s241
    %v243 = vmul.f32 %v232, %v242
    %v244 = vadd.f32 %v221, %v243
    %s245 = sld [smem:[#allocation2 + $0x7]]
    %v246 = vstv %s245
    %v247 = vmul.f32 %v73, %v246
    %s248 = sld [smem:[#allocation2 + $0x87]]
    %v249 = vstv %s248
    %v250 = vmul.f32 %v74, %v249
    %v251 = vadd.f32 %v247, %v250
    %s252 = sld [smem:[#allocation5 + $0x7]]
    %v253 = vstv %s252
    %v254 = vadd.f32 %v251, %v253
    %v255 = vmax.f32 %v254, 0.0
    %s256 = sld [smem:[#allocation7 + $0x380]]
    %v257 = vstv %s256
    %v258 = vmul.f32 %v255, %v257
    %v259 = vadd.f32 %v236, %v258
    %s260 = sld [smem:[#allocation7 + $0x381]]
    %v261 = vstv %s260
    %v262 = vmul.f32 %v255, %v261
    %v263 = vadd.f32 %v240, %v262
    %s264 = sld [smem:[#allocation7 + $0x382]]
    %v265 = vstv %s264
    %v266 = vmul.f32 %v255, %v265
    %v267 = vadd.f32 %v244, %v266
    %s268 = sld [smem:[#allocation2 + $0x8]]
    %v269 = vstv %s268
    %v270 = vmul.f32 %v73, %v269
    %s271 = sld [smem:[#allocation2 + $0x88]]
    %v272 = vstv %s271
    %v273 = vmul.f32 %v74, %v272
    %v274 = vadd.f32 %v270, %v273
    %s275 = sld [smem:[#allocation5 + $0x8]]
    %v276 = vstv %s275
    %v277 = vadd.f32 %v274, %v276
    %v278 = vmax.f32 %v277, 0.0
    %s279 = sld [smem:[#allocation7 + $0x400]]
    %v280 = vstv %s279
    %v281 = vmul.f32 %v278, %v280
    %v282 = vadd.f32 %v259, %v281
    %s283 = sld [smem:[#allocation7 + $0x401]]
    %v284 = vstv %s283
    %v285 = vmul.f32 %v278, %v284
    %v286 = vadd.f32 %v263, %v285
    %s287 = sld [smem:[#allocation7 + $0x402]]
    %v288 = vstv %s287
    %v289 = vmul.f32 %v278, %v288
    %v290 = vadd.f32 %v267, %v289
    %s291 = sld [smem:[#allocation2 + $0x9]]
    %v292 = vstv %s291
    %v293 = vmul.f32 %v73, %v292
    %s294 = sld [smem:[#allocation2 + $0x89]]
    %v295 = vstv %s294
    %v296 = vmul.f32 %v74, %v295
    %v297 = vadd.f32 %v293, %v296
    %s298 = sld [smem:[#allocation5 + $0x9]]
    %v299 = vstv %s298
    %v300 = vadd.f32 %v297, %v299
    %v301 = vmax.f32 %v300, 0.0
    %s302 = sld [smem:[#allocation7 + $0x480]]
    %v303 = vstv %s302
    %v304 = vmul.f32 %v301, %v303
    %v305 = vadd.f32 %v282, %v304
    %s306 = sld [smem:[#allocation7 + $0x481]]
    %v307 = vstv %s306
    %v308 = vmul.f32 %v301, %v307
    %v309 = vadd.f32 %v286, %v308
    %s310 = sld [smem:[#allocation7 + $0x482]]
    %v311 = vstv %s310
    %v312 = vmul.f32 %v301, %v311
    %v313 = vadd.f32 %v290, %v312
    %s314 = sld [smem:[#allocation2 + $0xa]]
    %v315 = vstv %s314
    %v316 = vmul.f32 %v73, %v315
    %s317 = sld [smem:[#allocation2 + $0x8a]]
    %v318 = vstv %s317
    %v319 = vmul.f32 %v74, %v318
    %v320 = vadd.f32 %v316, %v319
    %s321 = sld [smem:[#allocation5 + $0xa]]
    %v322 = vstv %s321
    %v323 = vadd.f32 %v320, %v322
    %v324 = vmax.f32 %v323, 0.0
    %s325 = sld [smem:[#allocation7 + $0x500]]
    %v326 = vstv %s325
    %v327 = vmul.f32 %v324, %v326
    %v328 = vadd.f32 %v305, %v327
    %s329 = sld [smem:[#allocation7 + $0x501]]
    %v330 = vstv %s329
    %v331 = vmul.f32 %v324, %v330
    %v332 = vadd.f32 %v309, %v331
    %s333 = sld [smem:[#allocation7 + $0x502]]
    %v334 = vstv %s333
    %v335 = vmul.f32 %v324, %v334
    %v336 = vadd.f32 %v313, %v335
    %s337 = sld [smem:[#allocation2 + $0xb]]
    %v338 = vstv %s337
    %v339 = vmul.f32 %v73, %v338
    %s340 = sld [smem:[#allocation2 + $0x8b]]
    %v341 = vstv %s340
    %v342 = vmul.f32 %v74, %v341
    %v343 = vadd.f32 %v339, %v342
    %s344 = sld [smem:[#allocation5 + $0xb]]
    %v345 = vstv %s344
    %v346 = vadd.f32 %v343, %v345
    %v347 = vmax.f32 %v346, 0.0
    %s348 = sld [smem:[#allocation7 + $0x580]]
    %v349 = vstv %s348
    %v350 = vmul.f32 %v347, %v349
    %v351 = vadd.f32 %v328, %v350
    %s352 = sld [smem:[#allocation7 + $0x581]]
    %v353 = vstv %s352
    %v354 = vmul.f32 %v347, %v353
    %v355 = vadd.f32 %v332, %v354
    %s356 = sld [smem:[#allocation7 + $0x582]]
    %v357 = vstv %s356
    %v358 = vmul.f32 %v347, %v357
    %v359 = vadd.f32 %v336, %v358
    %s360 = sld [smem:[#allocation2 + $0xc]]
    %v361 = vstv %s360
    %v362 = vmul.f32 %v73, %v361
    %s363 = sld [smem:[#allocation2 + $0x8c]]
    %v364 = vstv %s363
    %v365 = vmul.f32 %v74, %v364
    %v366 = vadd.f32 %v362, %v365
    %s367 = sld [smem:[#allocation5 + $0xc]]
    %v368 = vstv %s367
    %v369 = vadd.f32 %v366, %v368
    %v370 = vmax.f32 %v369, 0.0
    %s371 = sld [smem:[#allocation7 + $0x600]]
    %v372 = vstv %s371
    %v373 = vmul.f32 %v370, %v372
    %v374 = vadd.f32 %v351, %v373
    %s375 = sld [smem:[#allocation7 + $0x601]]
    %v376 = vstv %s375
    %v377 = vmul.f32 %v370, %v376
    %v378 = vadd.f32 %v355, %v377
    %s379 = sld [smem:[#allocation7 + $0x602]]
    %v380 = vstv %s379
    %v381 = vmul.f32 %v370, %v380
    %v382 = vadd.f32 %v359, %v381
    %s383 = sld [smem:[#allocation2 + $0xd]]
    %v384 = vstv %s383
    %v385 = vmul.f32 %v73, %v384
    %s386 = sld [smem:[#allocation2 + $0x8d]]
    %v387 = vstv %s386
    %v388 = vmul.f32 %v74, %v387
    %v389 = vadd.f32 %v385, %v388
    %s390 = sld [smem:[#allocation5 + $0xd]]
    %v391 = vstv %s390
    %v392 = vadd.f32 %v389, %v391
    %v393 = vmax.f32 %v392, 0.0
    %s394 = sld [smem:[#allocation7 + $0x680]]
    %v395 = vstv %s394
    %v396 = vmul.f32 %v393, %v395
    %v397 = vadd.f32 %v374, %v396
    %s398 = sld [smem:[#allocation7 + $0x681]]
    %v399 = vstv %s398
    %v400 = vmul.f32 %v393, %v399
    %v401 = vadd.f32 %v378, %v400
    %s402 = sld [smem:[#allocation7 + $0x682]]
    %v403 = vstv %s402
    %v404 = vmul.f32 %v393, %v403
    %v405 = vadd.f32 %v382, %v404
    %s406 = sld [smem:[#allocation2 + $0xe]]
    %v407 = vstv %s406
    %v408 = vmul.f32 %v73, %v407
    %s409 = sld [smem:[#allocation2 + $0x8e]]
    %v410 = vstv %s409
    %v411 = vmul.f32 %v74, %v410
    %v412 = vadd.f32 %v408, %v411
    %s413 = sld [smem:[#allocation5 + $0xe]]
    %v414 = vstv %s413
    %v415 = vadd.f32 %v412, %v414
    %v416 = vmax.f32 %v415, 0.0
    %s417 = sld [smem:[#allocation7 + $0x700]]
    %v418 = vstv %s417
    %v419 = vmul.f32 %v416, %v418
    %v420 = vadd.f32 %v397, %v419
    %s421 = sld [smem:[#allocation7 + $0x701]]
    %v422 = vstv %s421
    %v423 = vmul.f32 %v416, %v422
    %v424 = vadd.f32 %v401, %v423
    %s425 = sld [smem:[#allocation7 + $0x702]]
    %v426 = vstv %s425
    %v427 = vmul.f32 %v416, %v426
    %v428 = vadd.f32 %v405, %v427
    %s429 = sld [smem:[#allocation2 + $0xf]]
    %v430 = vstv %s429
    %v431 = vmul.f32 %v73, %v430
    %s432 = sld [smem:[#allocation2 + $0x8f]]
    %v433 = vstv %s432
    %v434 = vmul.f32 %v74, %v433
    %v435 = vadd.f32 %v431, %v434
    %s436 = sld [smem:[#allocation5 + $0xf]]
    %v437 = vstv %s436
    %v438 = vadd.f32 %v435, %v437
    %v439 = vmax.f32 %v438, 0.0
    %s440 = sld [smem:[#allocation7 + $0x780]]
    %v441 = vstv %s440
    %v442 = vmul.f32 %v439, %v441
    %v443 = vadd.f32 %v420, %v442
    %s444 = sld [smem:[#allocation7 + $0x781]]
    %v445 = vstv %s444
    %v446 = vmul.f32 %v439, %v445
    %v447 = vadd.f32 %v424, %v446
    %s448 = sld [smem:[#allocation7 + $0x782]]
    %v449 = vstv %s448
    %v450 = vmul.f32 %v439, %v449
    %v451 = vadd.f32 %v428, %v450
    %s452 = sld [smem:[#allocation2 + $0x10]]
    %v453 = vstv %s452
    %v454 = vmul.f32 %v73, %v453
    %s455 = sld [smem:[#allocation2 + $0x90]]
    %v456 = vstv %s455
    %v457 = vmul.f32 %v74, %v456
    %v458 = vadd.f32 %v454, %v457
    %s459 = sld [smem:[#allocation5 + $0x10]]
    %v460 = vstv %s459
    %v461 = vadd.f32 %v458, %v460
    %v462 = vmax.f32 %v461, 0.0
    %s463 = sld [smem:[#allocation7 + $0x800]]
    %v464 = vstv %s463
    %v465 = vmul.f32 %v462, %v464
    %v466 = vadd.f32 %v443, %v465
    %s467 = sld [smem:[#allocation7 + $0x801]]
    %v468 = vstv %s467
    %v469 = vmul.f32 %v462, %v468
    %v470 = vadd.f32 %v447, %v469
    %s471 = sld [smem:[#allocation7 + $0x802]]
    %v472 = vstv %s471
    %v473 = vmul.f32 %v462, %v472
    %v474 = vadd.f32 %v451, %v473
    %s475 = sld [smem:[#allocation2 + $0x11]]
    %v476 = vstv %s475
    %v477 = vmul.f32 %v73, %v476
    %s478 = sld [smem:[#allocation2 + $0x91]]
    %v479 = vstv %s478
    %v480 = vmul.f32 %v74, %v479
    %v481 = vadd.f32 %v477, %v480
    %s482 = sld [smem:[#allocation5 + $0x11]]
    %v483 = vstv %s482
    %v484 = vadd.f32 %v481, %v483
    %v485 = vmax.f32 %v484, 0.0
    %s486 = sld [smem:[#allocation7 + $0x880]]
    %v487 = vstv %s486
    %v488 = vmul.f32 %v485, %v487
    %v489 = vadd.f32 %v466, %v488
    %s490 = sld [smem:[#allocation7 + $0x881]]
    %v491 = vstv %s490
    %v492 = vmul.f32 %v485, %v491
    %v493 = vadd.f32 %v470, %v492
    %s494 = sld [smem:[#allocation7 + $0x882]]
    %v495 = vstv %s494
    %v496 = vmul.f32 %v485, %v495
    %v497 = vadd.f32 %v474, %v496
    %s498 = sld [smem:[#allocation2 + $0x12]]
    %v499 = vstv %s498
    %v500 = vmul.f32 %v73, %v499
    %s501 = sld [smem:[#allocation2 + $0x92]]
    %v502 = vstv %s501
    %v503 = vmul.f32 %v74, %v502
    %v504 = vadd.f32 %v500, %v503
    %s505 = sld [smem:[#allocation5 + $0x12]]
    %v506 = vstv %s505
    %v507 = vadd.f32 %v504, %v506
    %v508 = vmax.f32 %v507, 0.0
    %s509 = sld [smem:[#allocation7 + $0x900]]
    %v510 = vstv %s509
    %v511 = vmul.f32 %v508, %v510
    %v512 = vadd.f32 %v489, %v511
    %s513 = sld [smem:[#allocation7 + $0x901]]
    %v514 = vstv %s513
    %v515 = vmul.f32 %v508, %v514
    %v516 = vadd.f32 %v493, %v515
    %s517 = sld [smem:[#allocation7 + $0x902]]
    %v518 = vstv %s517
    %v519 = vmul.f32 %v508, %v518
    %v520 = vadd.f32 %v497, %v519
    %s521 = sld [smem:[#allocation2 + $0x13]]
    %v522 = vstv %s521
    %v523 = vmul.f32 %v73, %v522
    %s524 = sld [smem:[#allocation2 + $0x93]]
    %v525 = vstv %s524
    %v526 = vmul.f32 %v74, %v525
    %v527 = vadd.f32 %v523, %v526
    %s528 = sld [smem:[#allocation5 + $0x13]]
    %v529 = vstv %s528
    %v530 = vadd.f32 %v527, %v529
    %v531 = vmax.f32 %v530, 0.0
    %s532 = sld [smem:[#allocation7 + $0x980]]
    %v533 = vstv %s532
    %v534 = vmul.f32 %v531, %v533
    %v535 = vadd.f32 %v512, %v534
    %s536 = sld [smem:[#allocation7 + $0x981]]
    %v537 = vstv %s536
    %v538 = vmul.f32 %v531, %v537
    %v539 = vadd.f32 %v516, %v538
    %s540 = sld [smem:[#allocation7 + $0x982]]
    %v541 = vstv %s540
    %v542 = vmul.f32 %v531, %v541
    %v543 = vadd.f32 %v520, %v542
    %544 = vst [vmem:[#allocation10] sm:$0xff] %v535
    %s545 = scalar_lea.vmem [#allocation10], 8
    %546 = vst [vmem:[%s545] sm:$0xff] %v539
    %s547 = scalar_lea.vmem [#allocation10], 16
    %548 = vst [vmem:[%s547] sm:$0xff] %v543
    // Predicated region
    $region38: #{tpu_custom_call.1} parent=1 // pred_check
      _
    $region39: #{tpu_custom_call.1} parent=1 // pred_check_branch
      %550 = sbr.rel (0) target = $region41
    $region40: #{tpu_custom_call.1} parent=1 // pred_region
      %s552 = ssub.s32 384, 384
      %553 = vsyncadd [#allocation3], %s552
      %s554 = sshll.u32 [#allocation10], 4
      %s555 = int_to_ptr.vmem [resolvable:$true] %s554
      %560 = dma.vmem_to_hbm [thread:$0]  %s555, 384, %s5, [#allocation3], 128, 128, 8
    $region41: #{tpu_custom_call.1} parent=1 // pred_fallthru
      _
    // Predicated region
    $region42: #{tpu_custom_call.1} parent=1 // pred_check
      _
    $region43: #{tpu_custom_call.1} parent=1 // pred_check_branch
      %562 = sbr.rel (0) target = $region45
    $region44: #{tpu_custom_call.1} parent=1 // pred_region
      %563 = dma.done [#allocation3], 384
    $region45: #{tpu_custom_call.1} parent=1 // pred_fallthru
      _
    %564 = vsyncpa [#allocation3], 1
    %565 = vsyncpa [#allocation4], 1
    %566 = vsyncpa [#allocation6], 1
    %567 = vsyncpa [#allocation9], 1

</llo_original>
